<compile_context>
chip_gen: v7x
topology: tpu7x:2x2x1
jax: 0.10.0
libtpu: 0.0.40
codegen_flags: <defaults>
</compile_context>

<pallas_src>
import jax
import jax.numpy as jnp
from jax.experimental import pallas as pl
from jax.experimental.pallas import tpu as pltpu

_LANE = 128


def _round_up(x, m):
    return (x + m - 1) // m * m


def _decoder_kernel(z_ref, w1_ref, b1_ref, w2_ref, b2_ref, w3_ref, b3_ref,
                    logits_ref):
    # Layer 1: (TB, M) @ (M, H) + (1, H), ReLU   (bf16 MXU inputs, f32 acc)
    h = jnp.dot(z_ref[...], w1_ref[...], preferred_element_type=jnp.float32)
    h = jnp.maximum(h + b1_ref[...], 0.0)
    # Layer 2: (TB, H) @ (H, H) + (1, H), ReLU
    h = jnp.dot(h.astype(w2_ref.dtype), w2_ref[...],
                preferred_element_type=jnp.float32)
    h = jnp.maximum(h + b2_ref[...], 0.0)
    # Layer 3: (TB, H) @ (H, D_pad) + (1, D_pad)  -> Bernoulli logits
    logits = jnp.dot(h.astype(w3_ref.dtype), w3_ref[...],
                     preferred_element_type=jnp.float32)
    logits_ref[...] = logits + b3_ref[...]


@jax.jit
def bernoulli_decoder_forward(z, w1, b1, w2, b2, w3, b3):
    """Returns (logits, probs), each of shape (B, 28, 28) in float32."""
    B, M = z.shape
    H = w1.shape[1]
    D = w3.shape[1]          # 784
    D_pad = _round_up(D, _LANE)  # 896: lane-dense output, no masked stores

    # Batch tiling: TB=256 matches the v6e/v7x 256-wide MXU; small batches get
    # a single tile rounded up to the (8, 128) sublane constraint.
    TB = 256 if B >= 256 else _round_up(B, 8)
    B_pad = _round_up(B, TB)
    num_tiles = B_pad // TB

    # Layout / dtype prep at the call boundary.
    if B_pad != B:
        z_p = jnp.zeros((B_pad, M), jnp.float32).at[:B].set(z)
    else:
        z_p = z
    z_p = z_p.astype(jnp.bfloat16)
    w1_b = w1.astype(jnp.bfloat16)
    w2_b = w2.astype(jnp.bfloat16)
    w3_b = (jnp.zeros((H, D_pad), jnp.float32).at[:, :D].set(w3)
            .astype(jnp.bfloat16))
    b3_p = jnp.zeros((1, D_pad), jnp.float32).at[:, :D].set(b3)

    cost = pl.CostEstimate(
        flops=2 * B_pad * (M * H + H * H + H * D_pad),
        transcendentals=0,
        bytes_accessed=(z_p.size * 2 + w1_b.size * 2 + w2_b.size * 2
                        + w3_b.size * 2 + b1.size * 4 + b2.size * 4
                        + b3_p.size * 4 + B_pad * D_pad * 4),
    )

    logits_flat = pl.pallas_call(
        _decoder_kernel,
        out_shape=jax.ShapeDtypeStruct((B_pad, D_pad), jnp.float32),
        grid=(num_tiles,),
        in_specs=[
            pl.BlockSpec((TB, M), lambda i: (i, 0)),      # z: tiled over batch
            pl.BlockSpec((M, H), lambda i: (0, 0)),       # w1 (VMEM-resident)
            pl.BlockSpec((1, H), lambda i: (0, 0)),       # b1
            pl.BlockSpec((H, H), lambda i: (0, 0)),       # w2
            pl.BlockSpec((1, H), lambda i: (0, 0)),       # b2
            pl.BlockSpec((H, D_pad), lambda i: (0, 0)),   # w3 (lane-padded)
            pl.BlockSpec((1, D_pad), lambda i: (0, 0)),   # b3 (lane-padded)
        ],
        out_specs=pl.BlockSpec((TB, D_pad), lambda i: (i, 0)),
        compiler_params=pltpu.CompilerParams(
            dimension_semantics=("parallel",),
            vmem_limit_bytes=8 << 20),
        cost_estimate=cost,
    )(z_p, w1_b, b1, w2_b, b2, w3_b, b3_p)

    logits = logits_flat[:B, :D].reshape(B, 28, 28)
    # Bernoulli mean; derived outside the kernel to avoid a second output DMA.
    probs = jax.nn.sigmoid(logits)
    return logits, probs


def _reference_forward_f32(z, w1, b1, w2, b2, w3, b3):
    h = jnp.maximum(z @ w1 + b1, 0.0)
    h = jnp.maximum(h @ w2 + b2, 0.0)
    logits = (h @ w3 + b3).reshape(z.shape[0], 28, 28)
    return logits, jax.nn.sigmoid(logits)


def _reference_forward_bf16(z, w1, b1, w2, b2, w3, b3):
    # Mirrors the kernel's mixed precision (bf16 MXU inputs, f32 accumulation).
    zb = z.astype(jnp.bfloat16)
    h = jnp.dot(zb, w1.astype(jnp.bfloat16),
                preferred_element_type=jnp.float32)
    h = jnp.maximum(h + b1, 0.0)
    h = jnp.dot(h.astype(jnp.bfloat16), w2.astype(jnp.bfloat16),
                preferred_element_type=jnp.float32)
    h = jnp.maximum(h + b2, 0.0)
    logits = jnp.dot(h.astype(jnp.bfloat16), w3.astype(jnp.bfloat16),
                     preferred_element_type=jnp.float32) + b3
    logits = logits.reshape(z.shape[0], 28, 28)
    return logits, jax.nn.sigmoid(logits)


if __name__ == "__main__":
    B, M, H, D = 8, 32, 128, 28 * 28

    key = jax.random.PRNGKey(0)
    kz, k1, k2, k3 = jax.random.split(key, 4)

    # PyTorch Linear stores (out, in); we keep (in, out) so the kernel does
    # x @ W directly — same math.
    z = jax.random.normal(kz, (B, M), dtype=jnp.float32)
    w1 = jax.random.normal(k1, (M, H), dtype=jnp.float32) * 0.05
    b1 = jnp.zeros((1, H), dtype=jnp.float32)
    w2 = jax.random.normal(k2, (H, H), dtype=jnp.float32) * 0.05
    b2 = jnp.zeros((1, H), dtype=jnp.float32)
    w3 = jax.random.normal(k3, (H, D), dtype=jnp.float32) * 0.05
    b3 = jnp.zeros((1, D), dtype=jnp.float32)

    # TODO(synk): self.std is an unused nn.Parameter in the module's forward;
    # kept here only for parity, it takes no part in the computation.
    std_param = jnp.ones((28, 28), dtype=jnp.float32) * 0.5  # noqa: F841

    logits, probs = bernoulli_decoder_forward(z, w1, b1, w2, b2, w3, b3)
    jax.block_until_ready((logits, probs))

    assert logits.shape == (B, 28, 28) and probs.shape == (B, 28, 28)

    # Tight check vs a reference with the same bf16-weight mixed precision.
    ref_logits_bf, ref_probs_bf = _reference_forward_bf16(z, w1, b1, w2, b2, w3, b3)
    assert jnp.allclose(logits, ref_logits_bf, atol=2e-3, rtol=2e-3)
    assert jnp.allclose(probs, ref_probs_bf, atol=2e-3, rtol=2e-3)

    # Loose sanity check vs the full-f32 module semantics.
    ref_logits, ref_probs = _reference_forward_f32(z, w1, b1, w2, b2, w3, b3)
    assert jnp.allclose(logits, ref_logits, atol=5e-2, rtol=5e-2)
    assert jnp.allclose(probs, ref_probs, atol=5e-2, rtol=5e-2)

    # TODO(synk): td.Independent(td.Bernoulli(logits), 2) is a Distribution
    # object (log_prob/sample machinery), not a tensor op; the kernel returns
    # its defining parameters (logits, plus probs derived in the wrapper).
    print("KERNEL_OK")
</pallas_src>

<mosaic_0001>
module attributes {stable_mosaic.version = 11 : i64} {
  func.func @_decoder_kernel(%arg0: i32, %arg1: memref<8x32xbf16, #tpu.memory_space<vmem>>, %arg2: memref<32x128xbf16, #tpu.memory_space<vmem>>, %arg3: memref<1x128xf32, #tpu.memory_space<vmem>>, %arg4: memref<128x128xbf16, #tpu.memory_space<vmem>>, %arg5: memref<1x128xf32, #tpu.memory_space<vmem>>, %arg6: memref<128x896xbf16, #tpu.memory_space<vmem>>, %arg7: memref<1x896xf32, #tpu.memory_space<vmem>>, %arg8: memref<8x896xf32, #tpu.memory_space<vmem>>) attributes {dimension_semantics = [#tpu.dimension_semantics<parallel>], iteration_bounds = array<i64: 1>, scalar_prefetch = 0 : i64, scratch_operands = 0 : i64, tpu.core_type = #tpu.core_type<tc>, window_params = [{transform_indices = @transform_0, window_bounds = array<i64: 8, 32>}, {pipeline_mode = #tpu.pipeline_mode<synchronous>, transform_indices = @transform_1, window_bounds = array<i64: 32, 128>}, {pipeline_mode = #tpu.pipeline_mode<synchronous>, transform_indices = @transform_2, window_bounds = array<i64: 1, 128>}, {pipeline_mode = #tpu.pipeline_mode<synchronous>, transform_indices = @transform_3, window_bounds = array<i64: 128, 128>}, {pipeline_mode = #tpu.pipeline_mode<synchronous>, transform_indices = @transform_4, window_bounds = array<i64: 1, 128>}, {pipeline_mode = #tpu.pipeline_mode<synchronous>, transform_indices = @transform_5, window_bounds = array<i64: 128, 896>}, {pipeline_mode = #tpu.pipeline_mode<synchronous>, transform_indices = @transform_6, window_bounds = array<i64: 1, 896>}, {transform_indices = @transform_7, window_bounds = array<i64: 8, 896>}]} {
    %c0 = arith.constant 0 : index
    %c0_0 = arith.constant 0 : index
    %0 = vector.load %arg1[%c0, %c0_0] : memref<8x32xbf16, #tpu.memory_space<vmem>>, vector<8x32xbf16>
    %c0_1 = arith.constant 0 : index
    %c0_2 = arith.constant 0 : index
    %1 = vector.load %arg2[%c0_1, %c0_2] : memref<32x128xbf16, #tpu.memory_space<vmem>>, vector<32x128xbf16>
    %cst = arith.constant dense<0.000000e+00> : vector<8x128xf32>
    %2 = tpu.matmul %0, %1, %cst {dimension_numbers = #tpu.dot_dimension_numbers<[1], [0], [0], [1], [0, 0, 1, 1], [], []>} : vector<8x32xbf16>, vector<32x128xbf16>, vector<8x128xf32> -> vector<8x128xf32>
    %c0_3 = arith.constant 0 : index
    %c0_4 = arith.constant 0 : index
    %3 = vector.load %arg3[%c0_3, %c0_4] : memref<1x128xf32, #tpu.memory_space<vmem>>, vector<1x128xf32>
    %4 = vector.broadcast %3 : vector<1x128xf32> to vector<8x128xf32>
    %5 = arith.addf %2, %4 : vector<8x128xf32>
    %cst_5 = arith.constant 0.000000e+00 : f32
    %6 = vector.broadcast %cst_5 : f32 to vector<8x128xf32>
    %7 = arith.maximumf %5, %6 : vector<8x128xf32>
    %8 = arith.truncf %7 : vector<8x128xf32> to vector<8x128xbf16>
    %c0_6 = arith.constant 0 : index
    %c0_7 = arith.constant 0 : index
    %9 = vector.load %arg4[%c0_6, %c0_7] : memref<128x128xbf16, #tpu.memory_space<vmem>>, vector<128x128xbf16>
    %cst_8 = arith.constant dense<0.000000e+00> : vector<8x128xf32>
    %10 = tpu.matmul %8, %9, %cst_8 {dimension_numbers = #tpu.dot_dimension_numbers<[1], [0], [0], [1], [0, 0, 1, 1], [], []>} : vector<8x128xbf16>, vector<128x128xbf16>, vector<8x128xf32> -> vector<8x128xf32>
    %c0_9 = arith.constant 0 : index
    %c0_10 = arith.constant 0 : index
    %11 = vector.load %arg5[%c0_9, %c0_10] : memref<1x128xf32, #tpu.memory_space<vmem>>, vector<1x128xf32>
    %12 = vector.broadcast %11 : vector<1x128xf32> to vector<8x128xf32>
    %13 = arith.addf %10, %12 : vector<8x128xf32>
    %cst_11 = arith.constant 0.000000e+00 : f32
    %14 = vector.broadcast %cst_11 : f32 to vector<8x128xf32>
    %15 = arith.maximumf %13, %14 : vector<8x128xf32>
    %16 = arith.truncf %15 : vector<8x128xf32> to vector<8x128xbf16>
    %c0_12 = arith.constant 0 : index
    %c0_13 = arith.constant 0 : index
    %17 = vector.load %arg6[%c0_12, %c0_13] : memref<128x896xbf16, #tpu.memory_space<vmem>>, vector<128x896xbf16>
    %cst_14 = arith.constant dense<0.000000e+00> : vector<8x896xf32>
    %18 = tpu.matmul %16, %17, %cst_14 {dimension_numbers = #tpu.dot_dimension_numbers<[1], [0], [0], [1], [0, 0, 1, 1], [], []>} : vector<8x128xbf16>, vector<128x896xbf16>, vector<8x896xf32> -> vector<8x896xf32>
    %c0_15 = arith.constant 0 : index
    %c0_16 = arith.constant 0 : index
    %19 = vector.load %arg7[%c0_15, %c0_16] : memref<1x896xf32, #tpu.memory_space<vmem>>, vector<1x896xf32>
    %20 = vector.broadcast %19 : vector<1x896xf32> to vector<8x896xf32>
    %21 = arith.addf %18, %20 : vector<8x896xf32>
    %c0_17 = arith.constant 0 : index
    %c0_18 = arith.constant 0 : index
    %22 = vector.load %arg8[%c0_17, %c0_18] : memref<8x896xf32, #tpu.memory_space<vmem>>, vector<8x896xf32>
    tpu.vector_store %arg8[%c0_17, %c0_18], %21 {strides = array<i32>} : memref<8x896xf32, #tpu.memory_space<vmem>>, vector<8x896xf32>,
    return
  }
  func.func @transform_0(%arg0: i32) -> (i32, i32) {
    %c0_i32 = arith.constant 0 : i32
    %c0_i32_0 = arith.constant 0 : i32
    return %arg0, %c0_i32 : i32, i32
  }
  func.func @transform_1(%arg0: i32) -> (i32, i32) {
    %c0_i32 = arith.constant 0 : i32
    %c0_i32_0 = arith.constant 0 : i32
    %c0_i32_1 = arith.constant 0 : i32
    return %c0_i32, %c0_i32_0 : i32, i32
  }
  func.func @transform_2(%arg0: i32) -> (i32, i32) {
    %c0_i32 = arith.constant 0 : i32
    %c0_i32_0 = arith.constant 0 : i32
    %c0_i32_1 = arith.constant 0 : i32
    return %c0_i32, %c0_i32_0 : i32, i32
  }
  func.func @transform_3(%arg0: i32) -> (i32, i32) {
    %c0_i32 = arith.constant 0 : i32
    %c0_i32_0 = arith.constant 0 : i32
    %c0_i32_1 = arith.constant 0 : i32
    return %c0_i32, %c0_i32_0 : i32, i32
  }
  func.func @transform_4(%arg0: i32) -> (i32, i32) {
    %c0_i32 = arith.constant 0 : i32
    %c0_i32_0 = arith.constant 0 : i32
    %c0_i32_1 = arith.constant 0 : i32
    return %c0_i32, %c0_i32_0 : i32, i32
  }
  func.func @transform_5(%arg0: i32) -> (i32, i32) {
    %c0_i32 = arith.constant 0 : i32
    %c0_i32_0 = arith.constant 0 : i32
    %c0_i32_1 = arith.constant 0 : i32
    return %c0_i32, %c0_i32_0 : i32, i32
  }
  func.func @transform_6(%arg0: i32) -> (i32, i32) {
    %c0_i32 = arith.constant 0 : i32
    %c0_i32_0 = arith.constant 0 : i32
    %c0_i32_1 = arith.constant 0 : i32
    return %c0_i32, %c0_i32_0 : i32, i32
  }
  func.func @transform_7(%arg0: i32) -> (i32, i32) {
    %c0_i32 = arith.constant 0 : i32
    %c0_i32_0 = arith.constant 0 : i32
    return %arg0, %c0_i32 : i32, i32
  }
}

</mosaic_0001>

<llo_original>
// kernel: bernoulli_decoder_forward.1
$region0: #{bernoulli_decoder_forward.1}
  #allocation0 [shape = 'u32[]', space=smem, size = 0x4, offset = 0x4, fixed_abs, tag = 'smem constant byte address 0x4 - core index']
  #allocation1 [shape = 'u32[144,128]{1,0:T(1,128)}', space=vmem, size = 0x12000, scoped, tag = 'internal scratch']
  %s0 = inlined_call_operand.vmem [shape: bf16[8,32], index: 0, kind: input, shape index: {}]
  %s1 = inlined_call_operand.vmem [shape: bf16[32,128], index: 1, kind: input, shape index: {}]
  %s2 = inlined_call_operand.vmem [shape: f32[1,128], index: 2, kind: input, shape index: {}]
  %s3 = inlined_call_operand.vmem [shape: bf16[128,128], index: 3, kind: input, shape index: {}]
  %s4 = inlined_call_operand.vmem [shape: f32[1,128], index: 4, kind: input, shape index: {}]
  %s5 = inlined_call_operand.vmem [shape: bf16[128,896], index: 5, kind: input, shape index: {}]
  %s6 = inlined_call_operand.vmem [shape: f32[1,896], index: 6, kind: input, shape index: {}]
  %s7 = inlined_call_operand.vmem [shape: f32[8,896], index: 7, kind: output, shape index: {}]
  %s8 = sld [smem:[#allocation0]]
  $region38: #{bernoulli_decoder_forward.1} parent=0
    _
  %s10 = ssub.s32 1, %s8
  %s11 = scalar_select 0, %s10, %s8
  // Predicated region
  $region2: #{bernoulli_decoder_forward.1} parent=0 // pred_check
    _
  $region3: #{bernoulli_decoder_forward.1} parent=0 // pred_check_branch
    %13 = sbr.rel (0) target = $region5
  $region4: #{bernoulli_decoder_forward.1} parent=0 // pred_region
    _
  $region5: #{bernoulli_decoder_forward.1} parent=0 // pred_fallthru
    _
  // Predicated region
  $region6: #{bernoulli_decoder_forward.1} parent=0 // pred_check
    _
  $region7: #{bernoulli_decoder_forward.1} parent=0 // pred_check_branch
    %15 = sbr.rel (0) target = $region9
  $region8: #{bernoulli_decoder_forward.1} parent=0 // pred_region
    _
  $region9: #{bernoulli_decoder_forward.1} parent=0 // pred_fallthru
    _
  // Predicated region
  $region10: #{bernoulli_decoder_forward.1} parent=0 // pred_check
    _
  $region11: #{bernoulli_decoder_forward.1} parent=0 // pred_check_branch
    %17 = sbr.rel (0) target = $region13
  $region12: #{bernoulli_decoder_forward.1} parent=0 // pred_region
    _
  $region13: #{bernoulli_decoder_forward.1} parent=0 // pred_fallthru
    _
  // Predicated region
  $region14: #{bernoulli_decoder_forward.1} parent=0 // pred_check
    _
  $region15: #{bernoulli_decoder_forward.1} parent=0 // pred_check_branch
    %19 = sbr.rel (0) target = $region17
  $region16: #{bernoulli_decoder_forward.1} parent=0 // pred_region
    _
  $region17: #{bernoulli_decoder_forward.1} parent=0 // pred_fallthru
    _
  // Predicated region
  $region18: #{bernoulli_decoder_forward.1} parent=0 // pred_check
    _
  $region19: #{bernoulli_decoder_forward.1} parent=0 // pred_check_branch
    %21 = sbr.rel (0) target = $region21
  $region20: #{bernoulli_decoder_forward.1} parent=0 // pred_region
    _
  $region21: #{bernoulli_decoder_forward.1} parent=0 // pred_fallthru
    _
  // Predicated region
  $region22: #{bernoulli_decoder_forward.1} parent=0 // pred_check
    _
  $region23: #{bernoulli_decoder_forward.1} parent=0 // pred_check_branch
    %23 = sbr.rel (0) target = $region25
  $region24: #{bernoulli_decoder_forward.1} parent=0 // pred_region
    _
  $region25: #{bernoulli_decoder_forward.1} parent=0 // pred_fallthru
    _
  // Predicated region
  $region26: #{bernoulli_decoder_forward.1} parent=0 // pred_check
    _
  $region27: #{bernoulli_decoder_forward.1} parent=0 // pred_check_branch
    %25 = sbr.rel (0) target = $region29
  $region28: #{bernoulli_decoder_forward.1} parent=0 // pred_region
    _
  $region29: #{bernoulli_decoder_forward.1} parent=0 // pred_fallthru
    _
  %v27 = vld [vmem:[%s0] sm:$0xf]
  %v28 = vld [vmem:[%s1] sm:$0xf]
  %v29 = vld [vmem:[%s1 + $0x4] sm:$0xf]
  %v30 = vld [vmem:[%s1 + $0x8] sm:$0xf]
  %v31 = vld [vmem:[%s1 + $0xc] sm:$0xf]
  %v32 = vld [vmem:[%s2] sm:$0x1]
  %v34 = vlaneseq
  %v35 = vshrl.u32 %v34, 7
  %v36 = vsub.s32 0, %v35
  %v37 = vrot.slane %v32, %v36
  %v43 = vunpack.c.l.b16 %v28
  %v44 = vunpack.c.l.b16 %v29
  %v45 = vunpack.c.l.b16 %v30
  %v46 = vunpack.c.l.b16 %v31
  %v47 = vpack.c.b16 %v44, %v43
  %v48 = vpack.c.b16 %v46, %v45
  %vm51 = vcmask 261120
  %v53 = vsel %vm51, %v27, 0
  %55 = vmatprep.subr.bf16.mxu0 0
  %56 = vmatpush1.bf16.msra.mxu0 %v47
  %57 = vmatprep.subr.bf16.mxu0 0
  %58 = vmatpush1.bf16.msra.mxu0 %v48
  %59 = vmatprep.subr.bf16.mxu0 0
  %60 = vmatpush1.bf16.msra.mxu0 0
  %61 = vmatprep.subr.bf16.mxu0 0
  %62 = vmatpush1.bf16.msra.mxu0 0
  %63 = vmatprep.subr.bf16.mxu0 0
  %64 = vmatpush1.bf16.msra.mxu0 0
  %65 = vmatprep.subr.bf16.mxu0 0
  %66 = vmatpush1.bf16.msra.mxu0 0
  %67 = vmatprep.subr.bf16.mxu0 0
  %68 = vmatpush1.bf16.msra.mxu0 0
  %69 = vmatprep.subr.bf16.mxu0 0
  %70 = vmatpush1.bf16.msra.mxu0 0
  %71 = vmatprep.subr.bf16.mxu0 0
  %72 = vmatpush1.bf16.msra.mxu0 0
  %73 = vmatprep.subr.bf16.mxu0 0
  %74 = vmatpush1.bf16.msra.mxu0 0
  %75 = vmatprep.subr.bf16.mxu0 0
  %76 = vmatpush1.bf16.msra.mxu0 0
  %77 = vmatprep.subr.bf16.mxu0 0
  %78 = vmatpush1.bf16.msra.mxu0 0
  %79 = vmatprep.subr.bf16.mxu0 0
  %80 = vmatpush1.bf16.msra.mxu0 0
  %81 = vmatprep.subr.bf16.mxu0 0
  %82 = vmatpush1.bf16.msra.mxu0 0
  %83 = vmatprep.subr.bf16.mxu0 0
  %84 = vmatpush1.bf16.msra.mxu0 0
  %85 = vmatprep.subr.bf16.mxu0 0
  %86 = vmatpush1.bf16.msra.mxu0 0
  %87 = vmatprep.mubr.bf16.mxu0 0
  %88 = vmatmul.mubr.bf16.gmra.mrb[0].mxu0 %v53
  %v89 = vpop.f32.mrb[0].mxu0
  %v90 = vadd.f32 %v37, %v89
  %v91 = vpop.f32.mrb[0].mxu0
  %v92 = vpop.f32.mrb[0].mxu0
  %v93 = vpop.f32.mrb[0].mxu0
  %94 = vdwg.mxu0
  %v95 = vmax.f32 %v90, 0.0
  %v96 = vpack.c.bf16 %v95, %v95
  %v97 = vld [vmem:[%s3] sm:$0xf]
  %v98 = vld [vmem:[%s3 + $0x4] sm:$0xf]
  %v99 = vld [vmem:[%s3 + $0x8] sm:$0xf]
  %v100 = vld [vmem:[%s3 + $0xc] sm:$0xf]
  %v101 = vld [vmem:[%s3 + $0x10] sm:$0xf]
  %v102 = vld [vmem:[%s3 + $0x14] sm:$0xf]
  %v103 = vld [vmem:[%s3 + $0x18] sm:$0xf]
  %v104 = vld [vmem:[%s3 + $0x1c] sm:$0xf]
  %v105 = vld [vmem:[%s3 + $0x20] sm:$0xf]
  %v106 = vld [vmem:[%s3 + $0x24] sm:$0xf]
  %v107 = vld [vmem:[%s3 + $0x28] sm:$0xf]
  %v108 = vld [vmem:[%s3 + $0x2c] sm:$0xf]
  %v109 = vld [vmem:[%s3 + $0x30] sm:$0xf]
  %v110 = vld [vmem:[%s3 + $0x34] sm:$0xf]
  %v111 = vld [vmem:[%s3 + $0x38] sm:$0xf]
  %v112 = vld [vmem:[%s3 + $0x3c] sm:$0xf]
  %v113 = vld [vmem:[%s4] sm:$0x1]
  %v115 = vlaneseq
  %v116 = vshrl.u32 %v115, 7
  %v117 = vsub.s32 0, %v116
  %v118 = vrot.slane %v113, %v117
  %v136 = vunpack.c.l.b16 %v97
  %v137 = vunpack.c.l.b16 %v98
  %v138 = vunpack.c.l.b16 %v99
  %v139 = vunpack.c.l.b16 %v100
  %v140 = vunpack.c.l.b16 %v101
  %v141 = vunpack.c.l.b16 %v102
  %v142 = vunpack.c.l.b16 %v103
  %v143 = vunpack.c.l.b16 %v104
  %v144 = vunpack.c.l.b16 %v105
  %v145 = vunpack.c.l.b16 %v106
  %v146 = vunpack.c.l.b16 %v107
  %v147 = vunpack.c.l.b16 %v108
  %v148 = vunpack.c.l.b16 %v109
  %v149 = vunpack.c.l.b16 %v110
  %v150 = vunpack.c.l.b16 %v111
  %v151 = vunpack.c.l.b16 %v112
  %v152 = vpack.c.b16 %v137, %v136
  %v153 = vpack.c.b16 %v139, %v138
  %v154 = vpack.c.b16 %v141, %v140
  %v155 = vpack.c.b16 %v143, %v142
  %v156 = vpack.c.b16 %v145, %v144
  %v157 = vpack.c.b16 %v147, %v146
  %v158 = vpack.c.b16 %v149, %v148
  %v159 = vpack.c.b16 %v151, %v150
  %168 = vmatprep.subr.bf16.mxu0 0
  %169 = vmatpush1.bf16.msra.mxu0 %v152
  %170 = vmatprep.subr.bf16.mxu0 0
  %171 = vmatpush1.bf16.msra.mxu0 %v153
  %172 = vmatprep.subr.bf16.mxu0 0
  %173 = vmatpush1.bf16.msra.mxu0 %v154
  %174 = vmatprep.subr.bf16.mxu0 0
  %175 = vmatpush1.bf16.msra.mxu0 %v155
  %176 = vmatprep.subr.bf16.mxu0 0
  %177 = vmatpush1.bf16.msra.mxu0 %v156
  %178 = vmatprep.subr.bf16.mxu0 0
  %179 = vmatpush1.bf16.msra.mxu0 %v157
  %180 = vmatprep.subr.bf16.mxu0 0
  %181 = vmatpush1.bf16.msra.mxu0 %v158
  %182 = vmatprep.subr.bf16.mxu0 0
  %183 = vmatpush1.bf16.msra.mxu0 %v159
  %184 = vmatprep.subr.bf16.mxu0 0
  %185 = vmatpush1.bf16.msra.mxu0 0
  %186 = vmatprep.subr.bf16.mxu0 0
  %187 = vmatpush1.bf16.msra.mxu0 0
  %188 = vmatprep.subr.bf16.mxu0 0
  %189 = vmatpush1.bf16.msra.mxu0 0
  %190 = vmatprep.subr.bf16.mxu0 0
  %191 = vmatpush1.bf16.msra.mxu0 0
  %192 = vmatprep.subr.bf16.mxu0 0
  %193 = vmatpush1.bf16.msra.mxu0 0
  %194 = vmatprep.subr.bf16.mxu0 0
  %195 = vmatpush1.bf16.msra.mxu0 0
  %196 = vmatprep.subr.bf16.mxu0 0
  %197 = vmatpush1.bf16.msra.mxu0 0
  %198 = vmatprep.subr.bf16.mxu0 0
  %199 = vmatpush1.bf16.msra.mxu0 0
  %200 = vmatprep.mubr.bf16.mxu0 0
  %201 = vmatmul.mubr.bf16.gmra.mrb[0].mxu0 %v96
  %v202 = vpop.f32.mrb[0].mxu0
  %v203 = vadd.f32 %v118, %v202
  %v204 = vpop.f32.mrb[0].mxu0
  %v205 = vpop.f32.mrb[0].mxu0
  %v206 = vpop.f32.mrb[0].mxu0
  %207 = vdwg.mxu0
  %v208 = vmax.f32 %v203, 0.0
  %v209 = vpack.c.bf16 %v208, %v208
  %v210 = vld [vmem:[%s5] sm:$0xff]
  %v211 = vld [vmem:[%s5 + $0x8] sm:$0xff]
  %v212 = vld [vmem:[%s5 + $0x10] sm:$0xff]
  %v213 = vld [vmem:[%s5 + $0x18] sm:$0xf]
  %v214 = vld [vmem:[%s5 + $0x1c] sm:$0xff]
  %v215 = vld [vmem:[%s5 + $0x24] sm:$0xff]
  %v216 = vld [vmem:[%s5 + $0x2c] sm:$0xff]
  %v217 = vld [vmem:[%s5 + $0x34] sm:$0xf]
  %v218 = vld [vmem:[%s5 + $0x38] sm:$0xff]
  %v219 = vld [vmem:[%s5 + $0x40] sm:$0xff]
  %v220 = vld [vmem:[%s5 + $0x48] sm:$0xff]
  %v221 = vld [vmem:[%s5 + $0x50] sm:$0xf]
  %v222 = vld [vmem:[%s5 + $0x54] sm:$0xff]
  %v223 = vld [vmem:[%s5 + $0x5c] sm:$0xff]
  %v224 = vld [vmem:[%s5 + $0x64] sm:$0xff]
  %v225 = vld [vmem:[%s5 + $0x6c] sm:$0xf]
  %v226 = vld [vmem:[%s5 + $0x70] sm:$0xff]
  %v227 = vld [vmem:[%s5 + $0x78] sm:$0xff]
  %v228 = vld [vmem:[%s5 + $0x80] sm:$0xff]
  %v229 = vld [vmem:[%s5 + $0x88] sm:$0xf]
  %v230 = vld [vmem:[%s5 + $0x8c] sm:$0xff]
  %v231 = vld [vmem:[%s5 + $0x94] sm:$0xff]
  %v232 = vld [vmem:[%s5 + $0x9c] sm:$0xff]
  %v233 = vld [vmem:[%s5 + $0xa4] sm:$0xf]
  %v234 = vld [vmem:[%s5 + $0xa8] sm:$0xff]
  %v235 = vld [vmem:[%s5 + $0xb0] sm:$0xff]
  %v236 = vld [vmem:[%s5 + $0xb8] sm:$0xff]
  %v237 = vld [vmem:[%s5 + $0xc0] sm:$0xf]
  %v238 = vld [vmem:[%s5 + $0xc4] sm:$0xff]
  %v239 = vld [vmem:[%s5 + $0xcc] sm:$0xff]
  %v240 = vld [vmem:[%s5 + $0xd4] sm:$0xff]
  %v241 = vld [vmem:[%s5 + $0xdc] sm:$0xf]
  %v242 = vld [vmem:[%s5 + $0xe0] sm:$0xff]
  %v243 = vld [vmem:[%s5 + $0xe8] sm:$0xff]
  %v244 = vld [vmem:[%s5 + $0xf0] sm:$0xff]
  %v245 = vld [vmem:[%s5 + $0xf8] sm:$0xf]
  %v246 = vld [vmem:[%s5 + $0xfc] sm:$0xff]
  %v247 = vld [vmem:[%s5 + $0x104] sm:$0xff]
  %v248 = vld [vmem:[%s5 + $0x10c] sm:$0xff]
  %v249 = vld [vmem:[%s5 + $0x114] sm:$0xf]
  %v250 = vld [vmem:[%s5 + $0x118] sm:$0xff]
  %v251 = vld [vmem:[%s5 + $0x120] sm:$0xff]
  %v252 = vld [vmem:[%s5 + $0x128] sm:$0xff]
  %v253 = vld [vmem:[%s5 + $0x130] sm:$0xf]
  %v254 = vld [vmem:[%s5 + $0x134] sm:$0xff]
  %v255 = vld [vmem:[%s5 + $0x13c] sm:$0xff]
  %v256 = vld [vmem:[%s5 + $0x144] sm:$0xff]
  %v257 = vld [vmem:[%s5 + $0x14c] sm:$0xf]
  %v258 = vld [vmem:[%s5 + $0x150] sm:$0xff]
  %v259 = vld [vmem:[%s5 + $0x158] sm:$0xff]
  %v260 = vld [vmem:[%s5 + $0x160] sm:$0xff]
  %v261 = vld [vmem:[%s5 + $0x168] sm:$0xf]
  %v262 = vld [vmem:[%s5 + $0x16c] sm:$0xff]
  %v263 = vld [vmem:[%s5 + $0x174] sm:$0xff]
  %v264 = vld [vmem:[%s5 + $0x17c] sm:$0xff]
  %v265 = vld [vmem:[%s5 + $0x184] sm:$0xf]
  %v266 = vld [vmem:[%s5 + $0x188] sm:$0xff]
  %v267 = vld [vmem:[%s5 + $0x190] sm:$0xff]
  %v268 = vld [vmem:[%s5 + $0x198] sm:$0xff]
  %v269 = vld [vmem:[%s5 + $0x1a0] sm:$0xf]
  %v270 = vld [vmem:[%s5 + $0x1a4] sm:$0xff]
  %v271 = vld [vmem:[%s5 + $0x1ac] sm:$0xff]
  %v272 = vld [vmem:[%s5 + $0x1b4] sm:$0xff]
  %v273 = vld [vmem:[%s5 + $0x1bc] sm:$0xf]
  %v274 = vld [vmem:[%s6] sm:$0xff]
  %v276 = vlaneseq
  %v277 = vshrl.u32 %v276, 7
  %v278 = vsub.s32 0, %v277
  %v279 = vrot.slane %v274, %v278
  %v280 = vlaneseq
  %v281 = vshrl.u32 %v280, 7
  %v282 = vsub.s32 1, %v281
  %v283 = vrot.slane %v274, %v282
  %v284 = vlaneseq
  %v285 = vshrl.u32 %v284, 7
  %v286 = vsub.s32 2, %v285
  %v287 = vrot.slane %v274, %v286
  %v288 = vlaneseq
  %v289 = vshrl.u32 %v288, 7
  %v290 = vsub.s32 3, %v289
  %v291 = vrot.slane %v274, %v290
  %v292 = vlaneseq
  %v293 = vshrl.u32 %v292, 7
  %v294 = vsub.s32 4, %v293
  %v295 = vrot.slane %v274, %v294
  %v296 = vlaneseq
  %v297 = vshrl.u32 %v296, 7
  %v298 = vsub.s32 5, %v297
  %v299 = vrot.slane %v274, %v298
  %v300 = vlaneseq
  %v301 = vshrl.u32 %v300, 7
  %v302 = vsub.s32 6, %v301
  %v303 = vrot.slane %v274, %v302
  %v375 = vunpack.c.l.b16 %v210
  %v376 = vunpack.c.h.b16 %v210
  %v377 = vunpack.c.l.b16 %v211
  %v378 = vunpack.c.h.b16 %v211
  %v379 = vunpack.c.l.b16 %v212
  %v380 = vunpack.c.h.b16 %v212
  %v381 = vunpack.c.l.b16 %v213
  %v382 = vunpack.c.l.b16 %v214
  %v383 = vunpack.c.h.b16 %v214
  %v384 = vunpack.c.l.b16 %v215
  %v385 = vunpack.c.h.b16 %v215
  %v386 = vunpack.c.l.b16 %v216
  %v387 = vunpack.c.h.b16 %v216
  %v388 = vunpack.c.l.b16 %v217
  %v389 = vunpack.c.l.b16 %v218
  %v390 = vunpack.c.h.b16 %v218
  %v391 = vunpack.c.l.b16 %v219
  %v392 = vunpack.c.h.b16 %v219
  %v393 = vunpack.c.l.b16 %v220
  %v394 = vunpack.c.h.b16 %v220
  %v395 = vunpack.c.l.b16 %v221
  %v396 = vunpack.c.l.b16 %v222
  %v397 = vunpack.c.h.b16 %v222
  %v398 = vunpack.c.l.b16 %v223
  %v399 = vunpack.c.h.b16 %v223
  %v400 = vunpack.c.l.b16 %v224
  %v401 = vunpack.c.h.b16 %v224
  %v402 = vunpack.c.l.b16 %v225
  %v403 = vunpack.c.l.b16 %v226
  %v404 = vunpack.c.h.b16 %v226
  %v405 = vunpack.c.l.b16 %v227
  %v406 = vunpack.c.h.b16 %v227
  %v407 = vunpack.c.l.b16 %v228
  %v408 = vunpack.c.h.b16 %v228
  %v409 = vunpack.c.l.b16 %v229
  %v410 = vunpack.c.l.b16 %v230
  %v411 = vunpack.c.h.b16 %v230
  %v412 = vunpack.c.l.b16 %v231
  %v413 = vunpack.c.h.b16 %v231
  %v414 = vunpack.c.l.b16 %v232
  %v415 = vunpack.c.h.b16 %v232
  %v416 = vunpack.c.l.b16 %v233
  %v417 = vunpack.c.l.b16 %v234
  %v418 = vunpack.c.h.b16 %v234
  %v419 = vunpack.c.l.b16 %v235
  %v420 = vunpack.c.h.b16 %v235
  %v421 = vunpack.c.l.b16 %v236
  %v422 = vunpack.c.h.b16 %v236
  %v423 = vunpack.c.l.b16 %v237
  %v424 = vunpack.c.l.b16 %v238
  %v425 = vunpack.c.h.b16 %v238
  %v426 = vunpack.c.l.b16 %v239
  %v427 = vunpack.c.h.b16 %v239
  %v428 = vunpack.c.l.b16 %v240
  %v429 = vunpack.c.h.b16 %v240
  %v430 = vunpack.c.l.b16 %v241
  %v431 = vunpack.c.l.b16 %v242
  %v432 = vunpack.c.h.b16 %v242
  %v433 = vunpack.c.l.b16 %v243
  %v434 = vunpack.c.h.b16 %v243
  %v435 = vunpack.c.l.b16 %v244
  %v436 = vunpack.c.h.b16 %v244
  %v437 = vunpack.c.l.b16 %v245
  %v438 = vunpack.c.l.b16 %v246
  %v439 = vunpack.c.h.b16 %v246
  %v440 = vunpack.c.l.b16 %v247
  %v441 = vunpack.c.h.b16 %v247
  %v442 = vunpack.c.l.b16 %v248
  %v443 = vunpack.c.h.b16 %v248
  %v444 = vunpack.c.l.b16 %v249
  %v445 = vunpack.c.l.b16 %v250
  %v446 = vunpack.c.h.b16 %v250
  %v447 = vunpack.c.l.b16 %v251
  %v448 = vunpack.c.h.b16 %v251
  %v449 = vunpack.c.l.b16 %v252
  %v450 = vunpack.c.h.b16 %v252
  %v451 = vunpack.c.l.b16 %v253
  %v452 = vunpack.c.l.b16 %v254
  %v453 = vunpack.c.h.b16 %v254
  %v454 = vunpack.c.l.b16 %v255
  %v455 = vunpack.c.h.b16 %v255
  %v456 = vunpack.c.l.b16 %v256
  %v457 = vunpack.c.h.b16 %v256
  %v458 = vunpack.c.l.b16 %v257
  %v459 = vunpack.c.l.b16 %v258
  %v460 = vunpack.c.h.b16 %v258
  %v461 = vunpack.c.l.b16 %v259
  %v462 = vunpack.c.h.b16 %v259
  %v463 = vunpack.c.l.b16 %v260
  %v464 = vunpack.c.h.b16 %v260
  %v465 = vunpack.c.l.b16 %v261
  %v466 = vunpack.c.l.b16 %v262
  %v467 = vunpack.c.h.b16 %v262
  %v468 = vunpack.c.l.b16 %v263
  %v469 = vunpack.c.h.b16 %v263
  %v470 = vunpack.c.l.b16 %v264
  %v471 = vunpack.c.h.b16 %v264
  %v472 = vunpack.c.l.b16 %v265
  %v473 = vunpack.c.l.b16 %v266
  %v474 = vunpack.c.h.b16 %v266
  %v475 = vunpack.c.l.b16 %v267
  %v476 = vunpack.c.h.b16 %v267
  %v477 = vunpack.c.l.b16 %v268
  %v478 = vunpack.c.h.b16 %v268
  %v479 = vunpack.c.l.b16 %v269
  %v480 = vunpack.c.l.b16 %v270
  %v481 = vunpack.c.h.b16 %v270
  %v482 = vunpack.c.l.b16 %v271
  %v483 = vunpack.c.h.b16 %v271
  %v484 = vunpack.c.l.b16 %v272
  %v485 = vunpack.c.h.b16 %v272
  %v486 = vunpack.c.l.b16 %v273
  %v487 = vpack.c.b16 %v382, %v375
  %v488 = vpack.c.b16 %v383, %v376
  %v489 = vpack.c.b16 %v384, %v377
  %v490 = vpack.c.b16 %v385, %v378
  %v491 = vpack.c.b16 %v386, %v379
  %v492 = vpack.c.b16 %v387, %v380
  %v493 = vpack.c.b16 %v388, %v381
  %v494 = vpack.c.b16 %v396, %v389
  %v495 = vpack.c.b16 %v397, %v390
  %v496 = vpack.c.b16 %v398, %v391
  %v497 = vpack.c.b16 %v399, %v392
  %v498 = vpack.c.b16 %v400, %v393
  %v499 = vpack.c.b16 %v401, %v394
  %v500 = vpack.c.b16 %v402, %v395
  %v501 = vpack.c.b16 %v410, %v403
  %v502 = vpack.c.b16 %v411, %v404
  %v503 = vpack.c.b16 %v412, %v405
  %v504 = vpack.c.b16 %v413, %v406
  %v505 = vpack.c.b16 %v414, %v407
  %v506 = vpack.c.b16 %v415, %v408
  %v507 = vpack.c.b16 %v416, %v409
  %v508 = vpack.c.b16 %v424, %v417
  %v509 = vpack.c.b16 %v425, %v418
  %v510 = vpack.c.b16 %v426, %v419
  %v511 = vpack.c.b16 %v427, %v420
  %v512 = vpack.c.b16 %v428, %v421
  %v513 = vpack.c.b16 %v429, %v422
  %v514 = vpack.c.b16 %v430, %v423
  %v515 = vpack.c.b16 %v438, %v431
  %v516 = vpack.c.b16 %v439, %v432
  %v517 = vpack.c.b16 %v440, %v433
  %v518 = vpack.c.b16 %v441, %v434
  %v519 = vpack.c.b16 %v442, %v435
  %v520 = vpack.c.b16 %v443, %v436
  %v521 = vpack.c.b16 %v444, %v437
  %v522 = vpack.c.b16 %v452, %v445
  %v523 = vpack.c.b16 %v453, %v446
  %v524 = vpack.c.b16 %v454, %v447
  %v525 = vpack.c.b16 %v455, %v448
  %v526 = vpack.c.b16 %v456, %v449
  %v527 = vpack.c.b16 %v457, %v450
  %v528 = vpack.c.b16 %v458, %v451
  %v529 = vpack.c.b16 %v466, %v459
  %v530 = vpack.c.b16 %v467, %v460
  %v531 = vpack.c.b16 %v468, %v461
  %v532 = vpack.c.b16 %v469, %v462
  %v533 = vpack.c.b16 %v470, %v463
  %v534 = vpack.c.b16 %v471, %v464
  %v535 = vpack.c.b16 %v472, %v465
  %v536 = vpack.c.b16 %v480, %v473
  %v537 = vpack.c.b16 %v481, %v474
  %v538 = vpack.c.b16 %v482, %v475
  %v539 = vpack.c.b16 %v483, %v476
  %v540 = vpack.c.b16 %v484, %v477
  %v541 = vpack.c.b16 %v485, %v478
  %v542 = vpack.c.b16 %v486, %v479
  %599 = vmatprep.subr.bf16.mxu0 %v488
  %600 = vmatpush1.bf16.msra.mxu0 %v487
  %601 = vmatprep.subr.bf16.mxu0 %v495
  %602 = vmatpush1.bf16.msra.mxu0 %v494
  %603 = vmatprep.subr.bf16.mxu0 %v502
  %604 = vmatpush1.bf16.msra.mxu0 %v501
  %605 = vmatprep.subr.bf16.mxu0 %v509
  %606 = vmatpush1.bf16.msra.mxu0 %v508
  %607 = vmatprep.subr.bf16.mxu0 %v516
  %608 = vmatpush1.bf16.msra.mxu0 %v515
  %609 = vmatprep.subr.bf16.mxu0 %v523
  %610 = vmatpush1.bf16.msra.mxu0 %v522
  %611 = vmatprep.subr.bf16.mxu0 %v530
  %612 = vmatpush1.bf16.msra.mxu0 %v529
  %613 = vmatprep.subr.bf16.mxu0 %v537
  %614 = vmatpush1.bf16.msra.mxu0 %v536
  %615 = vmatprep.subr.bf16.mxu0 0
  %616 = vmatpush1.bf16.msra.mxu0 0
  %617 = vmatprep.subr.bf16.mxu0 0
  %618 = vmatpush1.bf16.msra.mxu0 0
  %619 = vmatprep.subr.bf16.mxu0 0
  %620 = vmatpush1.bf16.msra.mxu0 0
  %621 = vmatprep.subr.bf16.mxu0 0
  %622 = vmatpush1.bf16.msra.mxu0 0
  %623 = vmatprep.subr.bf16.mxu0 0
  %624 = vmatpush1.bf16.msra.mxu0 0
  %625 = vmatprep.subr.bf16.mxu0 0
  %626 = vmatpush1.bf16.msra.mxu0 0
  %627 = vmatprep.subr.bf16.mxu0 0
  %628 = vmatpush1.bf16.msra.mxu0 0
  %629 = vmatprep.subr.bf16.mxu0 0
  %630 = vmatpush1.bf16.msra.mxu0 0
  %631 = vmatprep.mubr.bf16.mxu0 0
  %632 = vmatmul.mubr.bf16.gmra.mrb[0].mxu0 %v209
  %v633 = vpop.f32.mrb[0].mxu0
  %v634 = vadd.f32 %v279, %v633
  %v635 = vpop.f32.mrb[0].mxu0
  %v636 = vadd.f32 %v283, %v635
  %v637 = vpop.f32.mrb[0].mxu0
  %v638 = vpop.f32.mrb[0].mxu0
  %639 = vdwg.mxu0
  %640 = vmatprep.subr.bf16.mxu0 %v490
  %641 = vmatpush1.bf16.msra.mxu0 %v489
  %642 = vmatprep.subr.bf16.mxu0 %v497
  %643 = vmatpush1.bf16.msra.mxu0 %v496
  %644 = vmatprep.subr.bf16.mxu0 %v504
  %645 = vmatpush1.bf16.msra.mxu0 %v503
  %646 = vmatprep.subr.bf16.mxu0 %v511
  %647 = vmatpush1.bf16.msra.mxu0 %v510
  %648 = vmatprep.subr.bf16.mxu0 %v518
  %649 = vmatpush1.bf16.msra.mxu0 %v517
  %650 = vmatprep.subr.bf16.mxu0 %v525
  %651 = vmatpush1.bf16.msra.mxu0 %v524
  %652 = vmatprep.subr.bf16.mxu0 %v532
  %653 = vmatpush1.bf16.msra.mxu0 %v531
  %654 = vmatprep.subr.bf16.mxu0 %v539
  %655 = vmatpush1.bf16.msra.mxu0 %v538
  %656 = vmatprep.subr.bf16.mxu0 0
  %657 = vmatpush1.bf16.msra.mxu0 0
  %658 = vmatprep.subr.bf16.mxu0 0
  %659 = vmatpush1.bf16.msra.mxu0 0
  %660 = vmatprep.subr.bf16.mxu0 0
  %661 = vmatpush1.bf16.msra.mxu0 0
  %662 = vmatprep.subr.bf16.mxu0 0
  %663 = vmatpush1.bf16.msra.mxu0 0
  %664 = vmatprep.subr.bf16.mxu0 0
  %665 = vmatpush1.bf16.msra.mxu0 0
  %666 = vmatprep.subr.bf16.mxu0 0
  %667 = vmatpush1.bf16.msra.mxu0 0
  %668 = vmatprep.subr.bf16.mxu0 0
  %669 = vmatpush1.bf16.msra.mxu0 0
  %670 = vmatprep.subr.bf16.mxu0 0
  %671 = vmatpush1.bf16.msra.mxu0 0
  %672 = vmatprep.mubr.bf16.mxu0 0
  %673 = vmatmul.mubr.bf16.gmra.mrb[0].mxu0 %v209
  %v674 = vpop.f32.mrb[0].mxu0
  %v675 = vadd.f32 %v287, %v674
  %v676 = vpop.f32.mrb[0].mxu0
  %v677 = vadd.f32 %v291, %v676
  %v678 = vpop.f32.mrb[0].mxu0
  %v679 = vpop.f32.mrb[0].mxu0
  %680 = vdwg.mxu0
  %681 = vmatprep.subr.bf16.mxu0 %v492
  %682 = vmatpush1.bf16.msra.mxu0 %v491
  %683 = vmatprep.subr.bf16.mxu0 %v499
  %684 = vmatpush1.bf16.msra.mxu0 %v498
  %685 = vmatprep.subr.bf16.mxu0 %v506
  %686 = vmatpush1.bf16.msra.mxu0 %v505
  %687 = vmatprep.subr.bf16.mxu0 %v513
  %688 = vmatpush1.bf16.msra.mxu0 %v512
  %689 = vmatprep.subr.bf16.mxu0 %v520
  %690 = vmatpush1.bf16.msra.mxu0 %v519
  %691 = vmatprep.subr.bf16.mxu0 %v527
  %692 = vmatpush1.bf16.msra.mxu0 %v526
  %693 = vmatprep.subr.bf16.mxu0 %v534
  %694 = vmatpush1.bf16.msra.mxu0 %v533
  %695 = vmatprep.subr.bf16.mxu0 %v541
  %696 = vmatpush1.bf16.msra.mxu0 %v540
  %697 = vmatprep.subr.bf16.mxu0 0
  %698 = vmatpush1.bf16.msra.mxu0 0
  %699 = vmatprep.subr.bf16.mxu0 0
  %700 = vmatpush1.bf16.msra.mxu0 0
  %701 = vmatprep.subr.bf16.mxu0 0
  %702 = vmatpush1.bf16.msra.mxu0 0
  %703 = vmatprep.subr.bf16.mxu0 0
  %704 = vmatpush1.bf16.msra.mxu0 0
  %705 = vmatprep.subr.bf16.mxu0 0
  %706 = vmatpush1.bf16.msra.mxu0 0
  %707 = vmatprep.subr.bf16.mxu0 0
  %708 = vmatpush1.bf16.msra.mxu0 0
  %709 = vmatprep.subr.bf16.mxu0 0
  %710 = vmatpush1.bf16.msra.mxu0 0
  %711 = vmatprep.subr.bf16.mxu0 0
  %712 = vmatpush1.bf16.msra.mxu0 0
  %713 = vmatprep.mubr.bf16.mxu0 0
  %714 = vmatmul.mubr.bf16.gmra.mrb[0].mxu0 %v209
  %v715 = vpop.f32.mrb[0].mxu0
  %v716 = vadd.f32 %v295, %v715
  %v717 = vpop.f32.mrb[0].mxu0
  %v718 = vadd.f32 %v299, %v717
  %v719 = vpop.f32.mrb[0].mxu0
  %v720 = vpop.f32.mrb[0].mxu0
  %721 = vdwg.mxu0
  %722 = vmatprep.subr.bf16.mxu0 0
  %723 = vmatpush1.bf16.msra.mxu0 %v493
  %724 = vmatprep.subr.bf16.mxu0 0
  %725 = vmatpush1.bf16.msra.mxu0 %v500
  %726 = vmatprep.subr.bf16.mxu0 0
  %727 = vmatpush1.bf16.msra.mxu0 %v507
  %728 = vmatprep.subr.bf16.mxu0 0
  %729 = vmatpush1.bf16.msra.mxu0 %v514
  %730 = vmatprep.subr.bf16.mxu0 0
  %731 = vmatpush1.bf16.msra.mxu0 %v521
  %732 = vmatprep.subr.bf16.mxu0 0
  %733 = vmatpush1.bf16.msra.mxu0 %v528
  %734 = vmatprep.subr.bf16.mxu0 0
  %735 = vmatpush1.bf16.msra.mxu0 %v535
  %736 = vmatprep.subr.bf16.mxu0 0
  %737 = vmatpush1.bf16.msra.mxu0 %v542
  %738 = vmatprep.subr.bf16.mxu0 0
  %739 = vmatpush1.bf16.msra.mxu0 0
  %740 = vmatprep.subr.bf16.mxu0 0
  %741 = vmatpush1.bf16.msra.mxu0 0
  %742 = vmatprep.subr.bf16.mxu0 0
  %743 = vmatpush1.bf16.msra.mxu0 0
  %744 = vmatprep.subr.bf16.mxu0 0
  %745 = vmatpush1.bf16.msra.mxu0 0
  %746 = vmatprep.subr.bf16.mxu0 0
  %747 = vmatpush1.bf16.msra.mxu0 0
  %748 = vmatprep.subr.bf16.mxu0 0
  %749 = vmatpush1.bf16.msra.mxu0 0
  %750 = vmatprep.subr.bf16.mxu0 0
  %751 = vmatpush1.bf16.msra.mxu0 0
  %752 = vmatprep.subr.bf16.mxu0 0
  %753 = vmatpush1.bf16.msra.mxu0 0
  %754 = vmatprep.mubr.bf16.mxu0 0
  %755 = vmatmul.mubr.bf16.gmra.mrb[0].mxu0 %v209
  %v756 = vpop.f32.mrb[0].mxu0
  %v757 = vadd.f32 %v303, %v756
  %v758 = vpop.f32.mrb[0].mxu0
  %v759 = vpop.f32.mrb[0].mxu0
  %v760 = vpop.f32.mrb[0].mxu0
  %761 = vdwg.mxu0
  %762 = vst [vmem:[%s7] sm:$0xff] %v634
  %763 = vst [vmem:[%s7 + $0x8] sm:$0xff] %v636
  %764 = vst [vmem:[%s7 + $0x10] sm:$0xff] %v675
  %765 = vst [vmem:[%s7 + $0x18] sm:$0xff] %v677
  %766 = vst [vmem:[%s7 + $0x20] sm:$0xff] %v716
  %767 = vst [vmem:[%s7 + $0x28] sm:$0xff] %v718
  %768 = vst [vmem:[%s7 + $0x30] sm:$0xff] %v757
  // Predicated region
  $region30: #{bernoulli_decoder_forward.1} parent=0 // pred_check
    _
  $region31: #{bernoulli_decoder_forward.1} parent=0 // pred_check_branch
    %770 = sbr.rel (0) target = $region33
  $region32: #{bernoulli_decoder_forward.1} parent=0 // pred_region
    _
  $region33: #{bernoulli_decoder_forward.1} parent=0 // pred_fallthru
    _
  // Predicated region
  $region34: #{bernoulli_decoder_forward.1} parent=0 // pred_check
    _
  $region35: #{bernoulli_decoder_forward.1} parent=0 // pred_check_branch
    %772 = sbr.rel (0) target = $region37
  $region36: #{bernoulli_decoder_forward.1} parent=0 // pred_region
    _
  $region37: #{bernoulli_decoder_forward.1} parent=0 // pred_fallthru
    _

</llo_original>
